<compile_context>
chip_gen: v7x
topology: tpu7x:2x2x1
jax: 0.10.0
libtpu: 0.0.40
codegen_flags: <defaults>
</compile_context>

<pallas_src>
import jax
import jax.numpy as jnp
from jax.experimental import pallas as pl
from jax.experimental.pallas import tpu as pltpu

_LANE = 128
_MAX_LANES = 8192
_MIN_GRID_STEPS = 4              # keep >= 2 blocks per TC after megacore split
_RAGGED_BLOCK_ELEMS = 64 * 1024  # rank-1 fallback block size (multiple of 128)


def _swish_kernel(x_ref, o_ref):
    x = x_ref[...]
    # Mem-bound elementwise op: compute in the native dtype.
    # TODO(synk): on v7x, if a bundle dump shows VALU saturation, switch to a
    # tanh-form sigmoid / approx reciprocal to route work to the idle EUP slot.
    o_ref[...] = (x * jax.nn.sigmoid(x)).astype(o_ref.dtype)


def _sublane_min(dtype) -> int:
    return {4: 8, 2: 16, 1: 32}.get(jnp.dtype(dtype).itemsize, 8)


def _largest_lane_width(total: int) -> int:
    """Largest multiple of 128 that divides `total`, capped at _MAX_LANES."""
    groups = total // _LANE
    for d in range(min(groups, _MAX_LANES // _LANE), 0, -1):
        if groups % d == 0:
            return _LANE * d
    return _LANE


def _block_budget():
    """(target_block_bytes, vmem_limit_bytes) tuned per TPU generation."""
    try:
        kind = jax.devices()[0].device_kind.lower()
    except Exception:
        kind = ""
    if "v7" in kind:
        # 6 MiB x (in+out) x double-buffer = 24 MiB; raise scoped VMEM for
        # headroom (v7x physical VMEM is 64 MiB per TensorCore).
        return 6 * 1024 * 1024, 48 * 1024 * 1024
    if "v6" in kind:
        # 4 MiB x 2 x 2 = 16 MiB fits v6e's 32 MiB default scoped VMEM.
        return 4 * 1024 * 1024, None
    # v5e and older / unknown: 2 MiB x 2 x 2 = 8 MiB fits the 16 MiB default.
    return 2 * 1024 * 1024, None


def _compiler_params(vmem_limit):
    kwargs = dict(dimension_semantics=("parallel",))
    if vmem_limit is not None:
        kwargs["vmem_limit_bytes"] = vmem_limit
    return pltpu.CompilerParams(**kwargs)


def _cost(n, itemsize):
    return pl.CostEstimate(
        flops=4 * n, transcendentals=n, bytes_accessed=2 * n * itemsize
    )


def _swish_2d(x_flat, n, dtype, target_bytes, vmem_limit):
    """Aligned path: zero-copy reshape to a lane-dense (rows, lanes) 2-D view."""
    itemsize = jnp.dtype(dtype).itemsize
    sub = _sublane_min(dtype)
    lanes = _largest_lane_width(n)
    rows = n // lanes

    if rows <= sub:
        rt = rows  # full-extent block along the sublane axis (always legal)
        grid_rows = 1
    else:
        # Target ~target_bytes per block, rounded to the dtype's sublane multiple.
        rt = target_bytes // (lanes * itemsize)
        rt = max(sub, (rt // sub) * sub)
        # Guarantee multiple grid steps when there is enough work, so each TC
        # still pipelines input/output DMAs after megacore sharding (v7x).
        if rows >= _MIN_GRID_STEPS * sub:
            rt = min(rt, max(sub, ((rows // _MIN_GRID_STEPS) // sub) * sub))
        elif rows >= 2 * sub:
            rt = min(rt, max(sub, ((rows // 2) // sub) * sub))
        rt = min(rt, (rows // sub) * sub)
        # Prefer an rt that divides rows: avoids a masked store / short DMA on
        # the trailing block.
        for cand in range(rt, sub - 1, -sub):
            if rows % cand == 0:
                rt = cand
                break
        grid_rows = pl.cdiv(rows, rt)

    x2d = x_flat.reshape(rows, lanes)
    out2d = pl.pallas_call(
        _swish_kernel,
        out_shape=jax.ShapeDtypeStruct((rows, lanes), dtype),
        grid_spec=pltpu.PrefetchScalarGridSpec(
            num_scalar_prefetch=0,
            grid=(grid_rows,),
            in_specs=[pl.BlockSpec((rt, lanes), lambda i: (i, 0))],
            out_specs=pl.BlockSpec((rt, lanes), lambda i: (i, 0)),
        ),
        compiler_params=_compiler_params(vmem_limit),
        cost_estimate=_cost(n, itemsize),
    )(x2d)
    return out2d.reshape(-1)


def _swish_1d(x_flat, n, dtype, vmem_limit):
    """Ragged path (n % 128 != 0): rank-1 blocks, masked partial trailing block.

    A rank-1 VMEM block occupies ~8x its data size (single sublane), so keep
    the block modest; this path is the uncommon fallback.
    """
    itemsize = jnp.dtype(dtype).itemsize
    if n <= _RAGGED_BLOCK_ELEMS:
        bs = n  # block equal to the full array dim is always legal
    else:
        bs = _RAGGED_BLOCK_ELEMS  # multiple of 128; trailing block is masked
    grid = pl.cdiv(n, bs)
    return pl.pallas_call(
        _swish_kernel,
        out_shape=jax.ShapeDtypeStruct((n,), dtype),
        grid_spec=pltpu.PrefetchScalarGridSpec(
            num_scalar_prefetch=0,
            grid=(grid,),
            in_specs=[pl.BlockSpec((bs,), lambda i: (i,))],
            out_specs=pl.BlockSpec((bs,), lambda i: (i,)),
        ),
        compiler_params=_compiler_params(vmem_limit),
        cost_estimate=_cost(n, itemsize),
    )(x_flat)


def swish(x: jax.Array) -> jax.Array:
    """Elementwise swish: x * sigmoid(x). Accepts any shape (e.g. NCHW)."""
    orig_shape = x.shape
    n = x.size
    if n == 0:
        return x

    target_bytes, vmem_limit = _block_budget()
    x_flat = x.reshape(-1)

    if n % _LANE == 0:
        out_flat = _swish_2d(x_flat, n, x.dtype, target_bytes, vmem_limit)
    else:
        out_flat = _swish_1d(x_flat, n, x.dtype, vmem_limit)

    return out_flat.reshape(orig_shape)


if __name__ == "__main__":
    key = jax.random.PRNGKey(0)
    k1, k2, k3 = jax.random.split(key, 3)

    # NCHW conv activation (primary case): 2*4*16*16 = 2048, multiple of 128.
    x1 = jax.random.normal(k1, (2, 4, 16, 16), dtype=jnp.float32)
    # Ragged size (not a multiple of 128): rank-1 path, single full-extent block.
    x2 = jax.random.normal(k2, (3, 7, 11), dtype=jnp.float32)
    # Ragged size spanning two rank-1 blocks: exercises the masked partial block.
    x3 = jax.random.normal(k3, (257, 257), dtype=jnp.float32)

    for x in (x1, x2, x3):
        y = jax.block_until_ready(swish(x))
        y_ref = x * jax.nn.sigmoid(x)
        assert y.shape == x.shape and y.dtype == x.dtype
        assert jnp.allclose(y, y_ref, atol=1e-6, rtol=1e-6)

    print("KERNEL_OK")
</pallas_src>

<mosaic_0001>
module attributes {stable_mosaic.version = 11 : i64} {
  func.func @_swish_kernel(%arg0: i32, %arg1: memref<1x2048xf32, #tpu.memory_space<vmem>>, %arg2: memref<1x2048xf32, #tpu.memory_space<vmem>>) attributes {dimension_semantics = [#tpu.dimension_semantics<parallel>], iteration_bounds = array<i64: 1>, scalar_prefetch = 0 : i64, scratch_operands = 0 : i64, tpu.core_type = #tpu.core_type<tc>, window_params = [{transform_indices = @transform_0, window_bounds = array<i64: 1, 2048>}, {transform_indices = @transform_1, window_bounds = array<i64: 1, 2048>}]} {
    %c0 = arith.constant 0 : index
    %c0_0 = arith.constant 0 : index
    %0 = vector.load %arg1[%c0, %c0_0] : memref<1x2048xf32, #tpu.memory_space<vmem>>, vector<1x2048xf32>
    %1 = arith.negf %0 : vector<1x2048xf32>
    %2 = math.exp %1 : vector<1x2048xf32>
    %cst = arith.constant 1.000000e+00 : f32
    %3 = vector.broadcast %cst : f32 to vector<1x2048xf32>
    %4 = arith.addf %3, %2 : vector<1x2048xf32>
    %5 = arith.divf %3, %4 : vector<1x2048xf32>
    %6 = arith.mulf %0, %5 : vector<1x2048xf32>
    %c0_1 = arith.constant 0 : index
    %c0_2 = arith.constant 0 : index
    %7 = vector.load %arg2[%c0_1, %c0_2] : memref<1x2048xf32, #tpu.memory_space<vmem>>, vector<1x2048xf32>
    tpu.vector_store %arg2[%c0_1, %c0_2], %6 {strides = array<i32>} : memref<1x2048xf32, #tpu.memory_space<vmem>>, vector<1x2048xf32>,
    return
  }
  func.func @transform_0(%arg0: i32) -> (i32, i32) {
    %c0_i32 = arith.constant 0 : i32
    %c0_i32_0 = arith.constant 0 : i32
    return %arg0, %c0_i32 : i32, i32
  }
  func.func @transform_1(%arg0: i32) -> (i32, i32) {
    %c0_i32 = arith.constant 0 : i32
    %c0_i32_0 = arith.constant 0 : i32
    return %arg0, %c0_i32 : i32, i32
  }
}

</mosaic_0001>

<llo_original>
// kernel: tpu_custom_call.1
$region0: #{tpu_custom_call.1}
  #allocation0 [shape = 'u32[]', space=smem, size = 0x4, offset = 0x4, fixed_abs, tag = 'smem constant byte address 0x4 - core index']
  #allocation1 [shape = 'u32[144,128]{1,0:T(1,128)}', space=vmem, size = 0x12000, scoped, tag = 'internal scratch']
  %s0 = inlined_call_operand.hbm [shape: f32[1,2048], index: 0, kind: input, shape index: {}]
  %s1 = inlined_call_operand.hbm [shape: f32[1,2048], index: 1, kind: output, shape index: {}]
  %s2 = sld [smem:[#allocation0]]
  $region18: #{tpu_custom_call.1} parent=0
    _
  %s4 = ssub.s32 1, %s2
  %s5 = scalar_select 0, %s4, %s2
  $region1: #{tpu_custom_call.1} parent=0
    #allocation2 [shape = 'u8[8192]{0}', space=vmem, size = 0x2000, scoped, tag = 'input window, operand 0, single buffered']
    #allocation3 [shape = 's32[1]{0}', space=sflag, size = 0x4, scoped, tag = 'scoped memory for tpu_custom_call.1']
    #allocation4 [shape = 's32[1]{0}', space=sflag, size = 0x4, scoped, tag = 'scoped memory for tpu_custom_call.1']
    #allocation5 [shape = 'u8[8192]{0}', space=vmem, size = 0x2000, scoped, tag = 'output window, operand 0, single buffered']
    %6 = vsyncpa [#allocation3], 0
    %7 = vsyncpa [#allocation4], 0
    // Predicated region
    $region2: #{tpu_custom_call.1} parent=1 // pred_check
      _
    $region3: #{tpu_custom_call.1} parent=1 // pred_check_branch
      %9 = sbr.rel (0) target = $region5
    $region4: #{tpu_custom_call.1} parent=1 // pred_region
      %s11 = ssub.s32 256, 256
      %12 = vsyncadd [#allocation3], %s11
      %s14 = sshll.u32 [#allocation2], 4
      %s15 = int_to_ptr.vmem [resolvable:$true] %s14
      %17 = dma.hbm_to_vmem [thread:$0]  %s0, 256, %s15, [#allocation3]
    $region5: #{tpu_custom_call.1} parent=1 // pred_fallthru
      _
    // Predicated region
    $region6: #{tpu_custom_call.1} parent=1 // pred_check
      _
    $region7: #{tpu_custom_call.1} parent=1 // pred_check_branch
      %19 = sbr.rel (0) target = $region9
    $region8: #{tpu_custom_call.1} parent=1 // pred_region
      %20 = dma.done [#allocation3], 256
    $region9: #{tpu_custom_call.1} parent=1 // pred_fallthru
      _
    %v21 = vld [vmem:[#allocation2] sm:$0xff]
    %v22 = vld [vmem:[#allocation2 + $0x8] sm:$0xff]
    %v23 = vxor.u32 %v21, 2147483648
    %v24 = vxor.u32 %v22, 2147483648
    %v25 = vmul.f32 %v23, 1.442695
    %v26 = vpow.pop %v25
    %v27 = vmul.f32 %v24, 1.442695
    %v28 = vpow.pop %v27
    %v29 = vadd.f32 %v26, 1.0
    %v30 = vadd.f32 %v28, 1.0
    %v31 = vrcp.pop %v29
    %v32 = vmul.f32 1.0, %v31
    %v33 = vrcp.pop %v30
    %v34 = vmul.f32 1.0, %v33
    %v35 = vmul.f32 %v21, %v32
    %v36 = vmul.f32 %v22, %v34
    %37 = vst [vmem:[#allocation5] sm:$0xff] %v35
    %38 = vst [vmem:[#allocation5 + $0x8] sm:$0xff] %v36
    // Predicated region
    $region10: #{tpu_custom_call.1} parent=1 // pred_check
      _
    $region11: #{tpu_custom_call.1} parent=1 // pred_check_branch
      %40 = sbr.rel (0) target = $region13
    $region12: #{tpu_custom_call.1} parent=1 // pred_region
      %s42 = ssub.s32 256, 256
      %43 = vsyncadd [#allocation4], %s42
      %s45 = sshll.u32 [#allocation5], 4
      %s46 = int_to_ptr.vmem [resolvable:$true] %s45
      %48 = dma.vmem_to_hbm [thread:$0]  %s46, 256, %s1, [#allocation4]
    $region13: #{tpu_custom_call.1} parent=1 // pred_fallthru
      _
    // Predicated region
    $region14: #{tpu_custom_call.1} parent=1 // pred_check
      _
    $region15: #{tpu_custom_call.1} parent=1 // pred_check_branch
      %50 = sbr.rel (0) target = $region17
    $region16: #{tpu_custom_call.1} parent=1 // pred_region
      %51 = dma.done [#allocation4], 256
    $region17: #{tpu_custom_call.1} parent=1 // pred_fallthru
      _
    %52 = vsyncpa [#allocation3], 1
    %53 = vsyncpa [#allocation4], 1

</llo_original>
